<compile_context>
chip_gen: v7x
topology: tpu7x:2x2x1
jax: 0.10.0
libtpu: 0.0.40
codegen_flags: <defaults>
</compile_context>

<pallas_src>
from typing import NamedTuple

import jax
import jax.numpy as jnp
from jax.experimental import pallas as pl
from jax.experimental.pallas import tpu as pltpu


def _round_up(x, m):
    return ((x + m - 1) // m) * m


def _lora_kernel(x_ref, w_ref, b_ref, a_ref, bm_ref, o_ref, acc_ref, xa_ref):
    # x_ref:  [tm, tk] bf16      w_ref:  [tk, tn] bf16
    # b_ref:  [1, tn]  f32       a_ref:  [tk, rp] bf16
    # bm_ref: [rp, tn] bf16      o_ref:  [tm, tn] (out dtype)
    # acc_ref:[tm, tn] f32       xa_ref: [tm, rp] f32   (persistent scratch)
    j = pl.program_id(1)
    k = pl.program_id(2)

    @pl.when(k == 0)
    def _init_acc():
        # Fold the bias into the accumulator init (removes a full-tile f32
        # VPU add and the separate zero fill from the finalize epilogue).
        acc_ref[...] = jnp.broadcast_to(b_ref[...], acc_ref.shape)

    x = x_ref[...]
    # Base path partial product, K-accumulated in f32.
    acc_ref[...] += jnp.dot(x, w_ref[...], preferred_element_type=jnp.float32)

    # x@A depends only on (i, k): accumulate it once per row block (j == 0)
    # and reuse the persistent xa scratch for every other N tile.  Safe
    # because only the M axis is "parallel" (a core never starts a row block
    # at j > 0).
    @pl.when(j == 0)
    def _lora_partial():
        @pl.when(k == 0)
        def _init_xa():
            xa_ref[...] = jnp.zeros_like(xa_ref)

        xa_ref[...] += jnp.dot(x, a_ref[...],
                               preferred_element_type=jnp.float32)

    @pl.when(k == pl.num_programs(2) - 1)
    def _finalize():
        # Note: xa is downcast to bf16 to feed the MXU (slight divergence from
        # PyTorch's f32 LoRA intermediate; accumulation stays f32).
        lora = jnp.dot(xa_ref[...].astype(bm_ref.dtype), bm_ref[...],
                       preferred_element_type=jnp.float32)
        o_ref[...] = (acc_ref[...] + lora).astype(o_ref.dtype)


class LoRAWeights(NamedTuple):
    w: jax.Array       # [Kp, Np] compute dtype (pre-cast, pre-padded)
    bias: jax.Array    # [1, Np]  f32
    a: jax.Array       # [Kp, rp] compute dtype
    bm: jax.Array      # [rp, Np] compute dtype
    d_in: int
    d_out: int
    tn: int
    tk: int
    rp: int


def preprocess_lora_weights(w, bias, a, bm, *, tn=1024, tk=512,
                            compute_dtype=jnp.bfloat16):
    """Cast + pad the weights ONCE (hoisted out of the per-call hot path).

    w: [D_in, D_out] (input-major, i.e. weight^T), bias: [D_out],
    a: [D_in, r], bm: [r, D_out].  Cache the returned LoRAWeights.
    """
    D_in, D_out = w.shape
    r = a.shape[1]
    tn = min(tn, _round_up(D_out, 128))
    tk = min(tk, _round_up(D_in, 128))
    Np = _round_up(D_out, tn)
    Kp = _round_up(D_in, tk)
    rp = _round_up(max(r, 128), 128)          # lane-aligned LoRA rank

    w2 = jnp.pad(w.astype(compute_dtype), ((0, Kp - D_in), (0, Np - D_out)))
    a2 = jnp.pad(a.astype(compute_dtype), ((0, Kp - D_in), (0, rp - r)))
    bm2 = jnp.pad(bm.astype(compute_dtype), ((0, rp - r), (0, Np - D_out)))
    b2 = jnp.pad(bias.astype(jnp.float32).reshape(1, D_out),
                 ((0, 0), (0, Np - D_out)))
    return LoRAWeights(w2, b2, a2, bm2, int(D_in), int(D_out),
                       int(tn), int(tk), int(rp))


def _vmem_limit_bytes():
    # Per-generation budget: half of physical VMEM, capped at 64 MiB
    # (v5e/v6e: 128 MiB -> 64 MiB limit; v7x: 64 MiB -> 32 MiB limit).
    try:
        cap = int(pltpu.get_tpu_info().vmem_capacity_bytes)
    except Exception:
        cap = 128 * 1024 * 1024
    return int(min(cap // 2, 64 * 1024 * 1024))


def lora_forward(x, weights: LoRAWeights, *, tm=512,
                 compute_dtype=jnp.bfloat16):
    """x: [B, S, D_in] -> [B, S, D_out] = x@W + bias + (x@A)@Bm (in x.dtype)."""
    orig_dtype = x.dtype
    B, S, D_in = x.shape
    assert D_in == weights.d_in, "x feature dim does not match weights"
    M = B * S
    D_out, tn, tk, rp = weights.d_out, weights.tn, weights.tk, weights.rp
    Kp, Np = weights.w.shape

    # Clamp tm for small problems: >=16 (bf16 (16,128) min tile), mult of 16.
    if M < tm:
        tm = max(16, _round_up(M, 16))
    Mp = _round_up(M, tm)

    x2 = x.reshape(M, D_in).astype(compute_dtype)
    x2 = jnp.pad(x2, ((0, Mp - M), (0, Kp - D_in)))

    gm, gn, gk = Mp // tm, Np // tn, Kp // tk

    itemsize = jnp.dtype(compute_dtype).itemsize
    flops = (2 * Mp * Kp * Np              # base GEMM
             + 2 * Mp * Kp * rp            # x @ A (once per row block)
             + 2 * Mp * rp * Np)           # xa @ Bm
    bytes_accessed = (
        x2.size * itemsize * gn                     # x re-streamed per N tile
        + weights.w.size * itemsize * gm            # W re-streamed per M tile
        + weights.a.size * itemsize * gm
        + weights.bm.size * itemsize * gm
        + weights.bias.size * 4 * gm
        + Mp * Np * jnp.dtype(orig_dtype).itemsize)

    out = pl.pallas_call(
        _lora_kernel,
        out_shape=jax.ShapeDtypeStruct((Mp, Np), orig_dtype),
        grid_spec=pltpu.PrefetchScalarGridSpec(
            num_scalar_prefetch=0,
            grid=(gm, gn, gk),
            in_specs=[
                pl.BlockSpec((tm, tk), lambda i, j, k: (i, k)),    # x
                pl.BlockSpec((tk, tn), lambda i, j, k: (k, j)),    # W
                pl.BlockSpec((1, tn), lambda i, j, k: (0, j)),     # bias
                # A is only consumed on the j == 0 pass; pin its block index
                # for j > 0 so the unused tile is not re-DMA'd every K step.
                pl.BlockSpec((tk, rp),
                             lambda i, j, k: (jnp.where(j == 0, k, 0), 0)),
                pl.BlockSpec((rp, tn), lambda i, j, k: (0, j)),    # Bm
            ],
            out_specs=pl.BlockSpec((tm, tn), lambda i, j, k: (i, j)),
            scratch_shapes=[
                pltpu.VMEM((tm, tn), jnp.float32),   # base accumulator
                pltpu.VMEM((tm, rp), jnp.float32),   # x @ A accumulator
            ],
        ),
        compiler_params=pltpu.CompilerParams(
            # Only M is "parallel": the xa-reuse trick requires each core to
            # visit j == 0 before j > 0 for a given row block (v7x megacore
            # would otherwise be allowed to start mid-row).
            dimension_semantics=("parallel", "arbitrary", "arbitrary"),
            vmem_limit_bytes=_vmem_limit_bytes(),
        ),
        cost_estimate=pl.CostEstimate(
            flops=flops, transcendentals=0, bytes_accessed=bytes_accessed),
    )(x2, weights.w, weights.bias, weights.a, weights.bm)

    return out[:M, :D_out].reshape(B, S, D_out)


if __name__ == "__main__":
    # Small, deterministic shapes consistent with a LoRA-wrapped Linear.
    B, S, D_in, D_out, R = 2, 64, 256, 256, 4

    key = jax.random.PRNGKey(0)
    kx, kw, kb, ka, kbm = jax.random.split(key, 5)

    x = jax.random.normal(kx, (B, S, D_in), dtype=jnp.float32)
    # Parameters (input-major layout, i.e. already weight^T).
    w = jax.random.normal(kw, (D_in, D_out), dtype=jnp.float32) * 0.05
    bias = jax.random.normal(kb, (D_out,), dtype=jnp.float32) * 0.01
    a = jax.random.normal(ka, (D_in, R), dtype=jnp.float32) * 0.1
    bm = jax.random.normal(kbm, (R, D_out), dtype=jnp.float32) * 0.1

    # Preprocess (cast + pad) once — cached in real use.  Small tiles here so
    # the demo exercises a real (2, 2, 2) grid with K accumulation and the
    # j==0 xa-reuse path.
    weights = preprocess_lora_weights(w, bias, a, bm, tn=128, tk=128)
    y = lora_forward(x, weights, tm=64)
    jax.block_until_ready(y)

    # Pure-JAX reference mirroring kernel numerics (bf16 operands, f32 accum).
    x2 = x.reshape(B * S, D_in).astype(jnp.bfloat16)
    wb = w.astype(jnp.bfloat16)
    ab = a.astype(jnp.bfloat16)
    bmb = bm.astype(jnp.bfloat16)
    base = jnp.dot(x2, wb, preferred_element_type=jnp.float32) + bias[None, :]
    xa = jnp.dot(x2, ab, preferred_element_type=jnp.float32)
    lora = jnp.dot(xa.astype(jnp.bfloat16), bmb,
                   preferred_element_type=jnp.float32)
    ref = (base + lora).reshape(B, S, D_out).astype(x.dtype)

    assert y.shape == (B, S, D_out)
    assert jnp.allclose(y, ref, atol=2e-2, rtol=2e-2), "mismatch vs reference"

    print("KERNEL_OK")
</pallas_src>

<mosaic_0001>
module attributes {stable_mosaic.version = 11 : i64} {
  func.func @_lora_kernel(%arg0: i32, %arg1: i32, %arg2: i32, %arg3: memref<64x128xbf16, #tpu.memory_space<vmem>>, %arg4: memref<128x128xbf16, #tpu.memory_space<vmem>>, %arg5: memref<1x128xf32, #tpu.memory_space<vmem>>, %arg6: memref<128x128xbf16, #tpu.memory_space<vmem>>, %arg7: memref<128x128xbf16, #tpu.memory_space<vmem>>, %arg8: memref<64x128xf32, #tpu.memory_space<vmem>>, %arg9: memref<64x128xf32, #tpu.memory_space<vmem>>, %arg10: memref<64x128xf32, #tpu.memory_space<vmem>>) attributes {dimension_semantics = [#tpu.dimension_semantics<parallel>, #tpu.dimension_semantics<arbitrary>, #tpu.dimension_semantics<arbitrary>], iteration_bounds = array<i64: 2, 2, 2>, scalar_prefetch = 0 : i64, scratch_operands = 2 : i64, tpu.core_type = #tpu.core_type<tc>, window_params = [{transform_indices = @transform_0, window_bounds = array<i64: 64, 128>}, {transform_indices = @transform_1, window_bounds = array<i64: 128, 128>}, {transform_indices = @transform_2, window_bounds = array<i64: 1, 128>}, {transform_indices = @transform_3, window_bounds = array<i64: 128, 128>}, {transform_indices = @transform_4, window_bounds = array<i64: 128, 128>}, {transform_indices = @transform_5, window_bounds = array<i64: 64, 128>}]} {
    %c0_i32 = arith.constant 0 : i32
    %0 = arith.cmpi eq, %arg2, %c0_i32 : i32
    %1 = arith.extui %0 : i1 to i32
    %c0_i32_0 = arith.constant 0 : i32
    %2 = arith.cmpi ne, %1, %c0_i32_0 : i32
    scf.if %2 {
      %c0_11 = arith.constant 0 : index
      %c0_12 = arith.constant 0 : index
      %15 = vector.load %arg5[%c0_11, %c0_12] : memref<1x128xf32, #tpu.memory_space<vmem>>, vector<1x128xf32>
      %16 = vector.shape_cast %15 : vector<1x128xf32> to vector<1x128xf32>
      %17 = vector.broadcast %16 : vector<1x128xf32> to vector<64x128xf32>
      %c0_13 = arith.constant 0 : index
      %c0_14 = arith.constant 0 : index
      %18 = vector.load %arg9[%c0_13, %c0_14] : memref<64x128xf32, #tpu.memory_space<vmem>>, vector<64x128xf32>
      tpu.vector_store %arg9[%c0_13, %c0_14], %17 {strides = array<i32>} : memref<64x128xf32, #tpu.memory_space<vmem>>, vector<64x128xf32>,
    } else {
    }
    %c0 = arith.constant 0 : index
    %c0_1 = arith.constant 0 : index
    %3 = vector.load %arg3[%c0, %c0_1] : memref<64x128xbf16, #tpu.memory_space<vmem>>, vector<64x128xbf16>
    %c0_2 = arith.constant 0 : index
    %c0_3 = arith.constant 0 : index
    %4 = vector.load %arg9[%c0_2, %c0_3] : memref<64x128xf32, #tpu.memory_space<vmem>>, vector<64x128xf32>
    %c0_4 = arith.constant 0 : index
    %c0_5 = arith.constant 0 : index
    %5 = vector.load %arg4[%c0_4, %c0_5] : memref<128x128xbf16, #tpu.memory_space<vmem>>, vector<128x128xbf16>
    %cst = arith.constant dense<0.000000e+00> : vector<64x128xf32>
    %6 = tpu.matmul %3, %5, %cst {dimension_numbers = #tpu.dot_dimension_numbers<[1], [0], [0], [1], [0, 0, 1, 1], [], []>} : vector<64x128xbf16>, vector<128x128xbf16>, vector<64x128xf32> -> vector<64x128xf32>
    %7 = arith.addf %4, %6 : vector<64x128xf32>
    %c0_6 = arith.constant 0 : index
    %c0_7 = arith.constant 0 : index
    %8 = vector.load %arg9[%c0_6, %c0_7] : memref<64x128xf32, #tpu.memory_space<vmem>>, vector<64x128xf32>
    tpu.vector_store %arg9[%c0_6, %c0_7], %7 {strides = array<i32>} : memref<64x128xf32, #tpu.memory_space<vmem>>, vector<64x128xf32>,
    %c0_i32_8 = arith.constant 0 : i32
    %9 = arith.cmpi eq, %arg1, %c0_i32_8 : i32
    %10 = arith.extui %9 : i1 to i32
    %c0_i32_9 = arith.constant 0 : i32
    %11 = arith.cmpi ne, %10, %c0_i32_9 : i32
    scf.if %11 {
      %c0_i32_11 = arith.constant 0 : i32
      %15 = arith.cmpi eq, %arg2, %c0_i32_11 : i32
      %16 = arith.extui %15 : i1 to i32
      %c0_i32_12 = arith.constant 0 : i32
      %17 = arith.cmpi ne, %16, %c0_i32_12 : i32
      scf.if %17 {
        %cst_20 = arith.constant 0.000000e+00 : f32
        %23 = vector.broadcast %cst_20 : f32 to vector<64x128xf32>
        %c0_21 = arith.constant 0 : index
        %c0_22 = arith.constant 0 : index
        %24 = vector.load %arg10[%c0_21, %c0_22] : memref<64x128xf32, #tpu.memory_space<vmem>>, vector<64x128xf32>
        tpu.vector_store %arg10[%c0_21, %c0_22], %23 {strides = array<i32>} : memref<64x128xf32, #tpu.memory_space<vmem>>, vector<64x128xf32>,
      } else {
      }
      %c0_13 = arith.constant 0 : index
      %c0_14 = arith.constant 0 : index
      %18 = vector.load %arg10[%c0_13, %c0_14] : memref<64x128xf32, #tpu.memory_space<vmem>>, vector<64x128xf32>
      %c0_15 = arith.constant 0 : index
      %c0_16 = arith.constant 0 : index
      %19 = vector.load %arg6[%c0_15, %c0_16] : memref<128x128xbf16, #tpu.memory_space<vmem>>, vector<128x128xbf16>
      %cst_17 = arith.constant dense<0.000000e+00> : vector<64x128xf32>
      %20 = tpu.matmul %3, %19, %cst_17 {dimension_numbers = #tpu.dot_dimension_numbers<[1], [0], [0], [1], [0, 0, 1, 1], [], []>} : vector<64x128xbf16>, vector<128x128xbf16>, vector<64x128xf32> -> vector<64x128xf32>
      %21 = arith.addf %18, %20 : vector<64x128xf32>
      %c0_18 = arith.constant 0 : index
      %c0_19 = arith.constant 0 : index
      %22 = vector.load %arg10[%c0_18, %c0_19] : memref<64x128xf32, #tpu.memory_space<vmem>>, vector<64x128xf32>
      tpu.vector_store %arg10[%c0_18, %c0_19], %21 {strides = array<i32>} : memref<64x128xf32, #tpu.memory_space<vmem>>, vector<64x128xf32>,
    } else {
    }
    %c1_i32 = arith.constant 1 : i32
    %12 = arith.cmpi eq, %arg2, %c1_i32 : i32
    %13 = arith.extui %12 : i1 to i32
    %c0_i32_10 = arith.constant 0 : i32
    %14 = arith.cmpi ne, %13, %c0_i32_10 : i32
    scf.if %14 {
      %c0_11 = arith.constant 0 : index
      %c0_12 = arith.constant 0 : index
      %15 = vector.load %arg10[%c0_11, %c0_12] : memref<64x128xf32, #tpu.memory_space<vmem>>, vector<64x128xf32>
      %16 = arith.truncf %15 : vector<64x128xf32> to vector<64x128xbf16>
      %c0_13 = arith.constant 0 : index
      %c0_14 = arith.constant 0 : index
      %17 = vector.load %arg7[%c0_13, %c0_14] : memref<128x128xbf16, #tpu.memory_space<vmem>>, vector<128x128xbf16>
      %cst_15 = arith.constant dense<0.000000e+00> : vector<64x128xf32>
      %18 = tpu.matmul %16, %17, %cst_15 {dimension_numbers = #tpu.dot_dimension_numbers<[1], [0], [0], [1], [0, 0, 1, 1], [], []>} : vector<64x128xbf16>, vector<128x128xbf16>, vector<64x128xf32> -> vector<64x128xf32>
      %c0_16 = arith.constant 0 : index
      %c0_17 = arith.constant 0 : index
      %19 = vector.load %arg9[%c0_16, %c0_17] : memref<64x128xf32, #tpu.memory_space<vmem>>, vector<64x128xf32>
      %20 = arith.addf %19, %18 : vector<64x128xf32>
      %c0_18 = arith.constant 0 : index
      %c0_19 = arith.constant 0 : index
      %21 = vector.load %arg8[%c0_18, %c0_19] : memref<64x128xf32, #tpu.memory_space<vmem>>, vector<64x128xf32>
      tpu.vector_store %arg8[%c0_18, %c0_19], %20 {strides = array<i32>} : memref<64x128xf32, #tpu.memory_space<vmem>>, vector<64x128xf32>,
    } else {
    }
    return
  }
  func.func @transform_0(%arg0: i32, %arg1: i32, %arg2: i32) -> (i32, i32) {
    %c0_i32 = arith.constant 0 : i32
    return %arg0, %arg2 : i32, i32
  }
  func.func @transform_1(%arg0: i32, %arg1: i32, %arg2: i32) -> (i32, i32) {
    %c0_i32 = arith.constant 0 : i32
    return %arg2, %arg1 : i32, i32
  }
  func.func @transform_2(%arg0: i32, %arg1: i32, %arg2: i32) -> (i32, i32) {
    %c0_i32 = arith.constant 0 : i32
    %c0_i32_0 = arith.constant 0 : i32
    return %c0_i32, %arg1 : i32, i32
  }
  func.func @transform_3(%arg0: i32, %arg1: i32, %arg2: i32) -> (i32, i32) {
    %c0_i32 = arith.constant 0 : i32
    %0 = arith.cmpi eq, %arg1, %c0_i32 : i32
    %c0_i32_0 = arith.constant 0 : i32
    %1 = arith.select %0, %arg2, %c0_i32_0 : i32
    %c0_i32_1 = arith.constant 0 : i32
    %c0_i32_2 = arith.constant 0 : i32
    return %1, %c0_i32_1 : i32, i32
  }
  func.func @transform_4(%arg0: i32, %arg1: i32, %arg2: i32) -> (i32, i32) {
    %c0_i32 = arith.constant 0 : i32
    %c0_i32_0 = arith.constant 0 : i32
    return %c0_i32, %arg1 : i32, i32
  }
  func.func @transform_5(%arg0: i32, %arg1: i32, %arg2: i32) -> (i32, i32) {
    %c0_i32 = arith.constant 0 : i32
    return %arg0, %arg1 : i32, i32
  }
}

</mosaic_0001>

<llo_original>
// kernel: tpu_custom_call.1
$region0: #{tpu_custom_call.1}
  #allocation0 [shape = 'u32[]', space=smem, size = 0x4, offset = 0x4, fixed_abs, tag = 'smem constant byte address 0x4 - core index']
  #allocation1 [shape = 'u32[144,128]{1,0:T(1,128)}', space=vmem, size = 0x12000, scoped, tag = 'internal scratch']
  #allocation2 [shape = 'f32[64,128]{1,0:T(8,128)}', space=vmem, size = 0x8000, scoped, tag = 'scratch operand']
  #allocation3 [shape = 'f32[64,128]{1,0:T(8,128)}', space=vmem, size = 0x8000, scoped, tag = 'scratch operand']
  %s0 = inlined_call_operand.hbm [shape: bf16[128,256], index: 0, kind: input, shape index: {}]
  %s1 = inlined_call_operand.hbm [shape: bf16[256,256], index: 1, kind: input, shape index: {}]
  %s2 = inlined_call_operand.hbm [shape: f32[1,256], index: 2, kind: input, shape index: {}]
  %s3 = inlined_call_operand.hbm [shape: bf16[256,128], index: 3, kind: input, shape index: {}]
  %s4 = inlined_call_operand.hbm [shape: bf16[128,256], index: 4, kind: input, shape index: {}]
  %s5 = inlined_call_operand.hbm [shape: f32[128,256], index: 5, kind: output, shape index: {}]
  %s6 = sld [smem:[#allocation0]]
  $region89: #{tpu_custom_call.1} parent=0
    _
  %s8 = ssub.s32 1, %s6
  %s9 = scalar_select 0, %s8, %s6
  $region1: #{tpu_custom_call.1} parent=0
    #allocation4 [shape = 'u8[32768]{0}', space=vmem, size = 0x8000, scoped, tag = 'input window, operand 0']
    #allocation5 [shape = 's32[2]{0}', space=sflag, size = 0x8, scoped, tag = 'scoped memory for tpu_custom_call.1']
    #allocation6 [shape = 's32[2]{0}', space=sflag, size = 0x8, scoped, tag = 'scoped memory for tpu_custom_call.1']
    #allocation7 [shape = 'u8[65536]{0}', space=vmem, size = 0x10000, scoped, tag = 'input window, operand 1']
    #allocation8 [shape = 's32[2]{0}', space=sflag, size = 0x8, scoped, tag = 'scoped memory for tpu_custom_call.1']
    #allocation9 [shape = 'u8[1024]{0}', space=vmem, size = 0x400, scoped, tag = 'input window, operand 2']
    #allocation10 [shape = 'u8[65536]{0}', space=vmem, size = 0x10000, scoped, tag = 'input window, operand 3']
    #allocation11 [shape = 's32[2]{0}', space=sflag, size = 0x8, scoped, tag = 'scoped memory for tpu_custom_call.1']
    #allocation12 [shape = 'u8[65536]{0}', space=vmem, size = 0x10000, scoped, tag = 'input window, operand 4']
    #allocation13 [shape = 'u8[65536]{0}', space=vmem, size = 0x10000, scoped, tag = 'output window, operand 0']
    %10 = vsyncpa [#allocation5], 0
    %s11 = scalar_lea.sflag [#allocation5], 1
    %12 = vsyncpa %s11, 0
    %13 = vsyncpa [#allocation8], 0
    %s14 = scalar_lea.sflag [#allocation8], 1
    %15 = vsyncpa %s14, 0
    %16 = vsyncpa [#allocation11], 0
    %s17 = scalar_lea.sflag [#allocation11], 1
    %18 = vsyncpa %s17, 0
    %19 = vsyncpa [#allocation6], 0
    %s20 = scalar_lea.sflag [#allocation6], 1
    %21 = vsyncpa %s20, 0
    loop: start=0, step=1, limit=10
    $region2: #{tpu_custom_call.1} parent=1 // loop_pre_header
      _
    $region3: #{tpu_custom_call.1} parent=1 // loop_header
      %s23 = sphi 0, %s27
      %p24 = scmp.ge.s32.totalorder %s23, 10
      %s30 = sphi 0, %s49
      %s31 = sphi 0, %s45
      %s32 = sphi 0, %s41
      %s33 = sphi 0, %s30
      %s34 = sphi 0, %s31
      %s35 = sphi 0, %s32
      %s36 = sphi 0, %s33
      %s37 = sphi 0, %s34
      %s38 = sphi 0, %s35
      %s54 = sphi 0, %s56
      %s57 = sphi 0, %s54
      %s58 = sphi 0, %s57
      %s74 = sphi 0, %s58
      %s82 = sphi 0, %s84
      %s85 = sphi 0, %s82
      %s86 = sphi 0, %s85
      %s102 = sphi 0, %s86
      %s108 = sphi 0, %s110
      %s111 = sphi 0, %s108
      %s112 = sphi 0, %s111
      %s128 = sphi 0, %s112
      %s138 = sphi 0, %s140
      %s141 = sphi 0, %s138
      %s142 = sphi 0, %s141
      %s158 = sphi 0, %s142
      %s164 = sphi 0, %s166
      %s167 = sphi 0, %s164
      %s168 = sphi 0, %s167
      %s184 = sphi 0, %s168
      %s192 = sphi 0, %s194
      %s195 = sphi 0, %s192
      %s196 = sphi 0, %s195
      %s212 = sphi 0, %s196
    $region4: #{tpu_custom_call.1} parent=1 // loop_header_branch
      %26 = sbr.rel (%p24) target = $region8
    $region5: #{tpu_custom_call.1} parent=1 // loop_body
      %s28 = ssub.s32 %s23, 1
      %s29 = ssub.s32 %s23, 2
      %s39 = sadd.s32 1, %s32
      %p40 = scmp.ge.s32.totalorder %s39, 2
      %s41 = scalar_select %p40, 0, %s39
      %s42 = sadd.s32 1, %s31
      %s43 = scalar_select %p40, %s42, %s31
      %p44 = scmp.ge.s32.totalorder %s43, 2
      %s45 = scalar_select %p44, 0, %s43
      %s46 = sadd.s32 1, %s30
      %s47 = scalar_select %p44, %s46, %s30
      %p48 = scmp.ge.s32.totalorder %s47, 2
      %s49 = scalar_select %p48, 0, %s47
      %s50 = ssub.s32 %s30, %s49
      %s51 = ssub.s32 %s32, %s41
      %s52 = sor.u32 %s50, %s51
      %p53 = scmp.eq.s32.totalorder %s52, 0
      %s55 = sadd.s32 %s54, 1
      %s56 = scalar_select %p53, %s54, %s55
      %p59 = pneg %p53
      %p60 = scmp.eq.s32.totalorder %s23, 7
      %p61 = por %p59, %p60
      %p62 = scmp.ne.s32.totalorder %s54, %s57
      %p63 = scmp.eq.s32.totalorder %s23, 0
      %p64 = por %p62, %p63
      %p65 = scmp.ne.s32.totalorder %s54, %s57
      %p66 = scmp.eq.s32.totalorder %s28, 7
      %p67 = por %p65, %p66
      %p68 = scmp.ne.s32.totalorder %s57, %s58
      %p69 = scmp.eq.s32.totalorder %s28, 0
      %p70 = por %p68, %p69
      %p71 = scmp.ne.s32.totalorder %s57, %s58
      %p72 = scmp.eq.s32.totalorder %s29, 7
      %p73 = por %p71, %p72
      %p75 = scmp.ne.s32.totalorder %s58, %s74
      %p76 = scmp.eq.s32.totalorder %s29, 0
      %p77 = por %p75, %p76
      %s78 = ssub.s32 %s32, %s41
      %s79 = ssub.s32 %s31, %s45
      %s80 = sor.u32 %s78, %s79
      %p81 = scmp.eq.s32.totalorder %s80, 0
      %s83 = sadd.s32 %s82, 1
      %s84 = scalar_select %p81, %s82, %s83
      %p87 = pneg %p81
      %p88 = scmp.eq.s32.totalorder %s23, 7
      %p89 = por %p87, %p88
      %p90 = scmp.ne.s32.totalorder %s82, %s85
      %p91 = scmp.eq.s32.totalorder %s23, 0
      %p92 = por %p90, %p91
      %p93 = scmp.ne.s32.totalorder %s82, %s85
      %p94 = scmp.eq.s32.totalorder %s28, 7
      %p95 = por %p93, %p94
      %p96 = scmp.ne.s32.totalorder %s85, %s86
      %p97 = scmp.eq.s32.totalorder %s28, 0
      %p98 = por %p96, %p97
      %p99 = scmp.ne.s32.totalorder %s85, %s86
      %p100 = scmp.eq.s32.totalorder %s29, 7
      %p101 = por %p99, %p100
      %p103 = scmp.ne.s32.totalorder %s86, %s102
      %p104 = scmp.eq.s32.totalorder %s29, 0
      %p105 = por %p103, %p104
      %s106 = ssub.s32 %s31, %s45
      %p107 = scmp.eq.s32.totalorder %s106, 0
      %s109 = sadd.s32 %s108, 1
      %s110 = scalar_select %p107, %s108, %s109
      %p113 = pneg %p107
      %p114 = scmp.eq.s32.totalorder %s23, 7
      %p115 = por %p113, %p114
      %p116 = scmp.ne.s32.totalorder %s108, %s111
      %p117 = scmp.eq.s32.totalorder %s23, 0
      %p118 = por %p116, %p117
      %p119 = scmp.ne.s32.totalorder %s108, %s111
      %p120 = scmp.eq.s32.totalorder %s28, 7
      %p121 = por %p119, %p120
      %p122 = scmp.ne.s32.totalorder %s111, %s112
      %p123 = scmp.eq.s32.totalorder %s28, 0
      %p124 = por %p122, %p123
      %p125 = scmp.ne.s32.totalorder %s111, %s112
      %p126 = scmp.eq.s32.totalorder %s29, 7
      %p127 = por %p125, %p126
      %p129 = scmp.ne.s32.totalorder %s112, %s128
      %p130 = scmp.eq.s32.totalorder %s29, 0
      %p131 = por %p129, %p130
      %p132 = scmp.eq.s32.totalorder %s31, 0
      %s133 = scalar_select %p132, %s32, 0
      %p134 = scmp.eq.s32.totalorder %s45, 0
      %s135 = scalar_select %p134, %s41, 0
      %s136 = ssub.s32 %s133, %s135
      %p137 = scmp.eq.s32.totalorder %s136, 0
      %s139 = sadd.s32 %s138, 1
      %s140 = scalar_select %p137, %s138, %s139
      %p143 = pneg %p137
      %p144 = scmp.eq.s32.totalorder %s23, 7
      %p145 = por %p143, %p144
      %p146 = scmp.ne.s32.totalorder %s138, %s141
      %p147 = scmp.eq.s32.totalorder %s23, 0
      %p148 = por %p146, %p147
      %p149 = scmp.ne.s32.totalorder %s138, %s141
      %p150 = scmp.eq.s32.totalorder %s28, 7
      %p151 = por %p149, %p150
      %p152 = scmp.ne.s32.totalorder %s141, %s142
      %p153 = scmp.eq.s32.totalorder %s28, 0
      %p154 = por %p152, %p153
      %p155 = scmp.ne.s32.totalorder %s141, %s142
      %p156 = scmp.eq.s32.totalorder %s29, 7
      %p157 = por %p155, %p156
      %p159 = scmp.ne.s32.totalorder %s142, %s158
      %p160 = scmp.eq.s32.totalorder %s29, 0
      %p161 = por %p159, %p160
      %s162 = ssub.s32 %s31, %s45
      %p163 = scmp.eq.s32.totalorder %s162, 0
      %s165 = sadd.s32 %s164, 1
      %s166 = scalar_select %p163, %s164, %s165
      %p169 = pneg %p163
      %p170 = scmp.eq.s32.totalorder %s23, 7
      %p171 = por %p169, %p170
      %p172 = scmp.ne.s32.totalorder %s164, %s167
      %p173 = scmp.eq.s32.totalorder %s23, 0
      %p174 = por %p172, %p173
      %p175 = scmp.ne.s32.totalorder %s164, %s167
      %p176 = scmp.eq.s32.totalorder %s28, 7
      %p177 = por %p175, %p176
      %p178 = scmp.ne.s32.totalorder %s167, %s168
      %p179 = scmp.eq.s32.totalorder %s28, 0
      %p180 = por %p178, %p179
      %p181 = scmp.ne.s32.totalorder %s167, %s168
      %p182 = scmp.eq.s32.totalorder %s29, 7
      %p183 = por %p181, %p182
      %p185 = scmp.ne.s32.totalorder %s168, %s184
      %p186 = scmp.eq.s32.totalorder %s29, 0
      %p187 = por %p185, %p186
      %s188 = ssub.s32 %s30, %s49
      %s189 = ssub.s32 %s31, %s45
      %s190 = sor.u32 %s188, %s189
      %p191 = scmp.eq.s32.totalorder %s190, 0
      %s193 = sadd.s32 %s192, 1
      %s194 = scalar_select %p191, %s192, %s193
      %p197 = pneg %p191
      %p198 = scmp.eq.s32.totalorder %s23, 7
      %p199 = por %p197, %p198
      %p200 = scmp.ne.s32.totalorder %s192, %s195
      %p201 = scmp.eq.s32.totalorder %s23, 0
      %p202 = por %p200, %p201
      %p203 = scmp.ne.s32.totalorder %s192, %s195
      %p204 = scmp.eq.s32.totalorder %s28, 7
      %p205 = por %p203, %p204
      %p206 = scmp.ne.s32.totalorder %s195, %s196
      %p207 = scmp.eq.s32.totalorder %s28, 0
      %p208 = por %p206, %p207
      %p209 = scmp.ne.s32.totalorder %s195, %s196
      %p210 = scmp.eq.s32.totalorder %s29, 7
      %p211 = por %p209, %p210
      %p213 = scmp.ne.s32.totalorder %s196, %s212
      %p214 = scmp.eq.s32.totalorder %s29, 0
      %p215 = por %p213, %p214
      %p216 = scmp.le.s32.totalorder 1, %s23
      %p217 = scmp.lt.s32.totalorder %s23, 9
      %p218 = pnand %p216, %p217
      %p219 = pneg %p218
      // Predicated region
      $region9: #{tpu_custom_call.1} parent=5 // pred_check
        _
      $region10: #{tpu_custom_call.1} parent=5 // pred_check_branch
        %221 = sbr.rel (%p218) target = $region12
      $region11: #{tpu_custom_call.1} parent=5 // pred_region
        %s222 = ssub.s32 %s23, 1
      $region12: #{tpu_custom_call.1} parent=5 // pred_fallthru
        _
      %p223 = scmp.lt.s32.totalorder %s23, 8
      // Predicated region
      $region13: #{tpu_custom_call.1} parent=5 // pred_check
        %p224 = pneg %p223
      $region14: #{tpu_custom_call.1} parent=5 // pred_check_branch
        %226 = sbr.rel (%p224) target = $region16
      $region15: #{tpu_custom_call.1} parent=5 // pred_region
        // Predicated region
        $region17: #{tpu_custom_call.1} parent=15 // pred_check
          %p227 = pneg %p64
        $region18: #{tpu_custom_call.1} parent=15 // pred_check_branch
          %229 = sbr.rel (%p227) target = $region20
        $region19: #{tpu_custom_call.1} parent=15 // pred_region
          %s230 = sand.u32 %s54, 1
          %s231 = scalar_lea.sflag [#allocation5], %s230
          %s232 = sand.u32 %s54, 1
          %s233 = smul.addr %s232, 32
          %s234 = scalar_lea.vmem [#allocation4], %s233
          %s235 = smul.u32 8, %s30
          %s237 = ssub.s32 512, 512
          %238 = vsyncadd %s231, %s237
          %s239 = smul.addr %s235, 2
          %s240 = sadd.s32 %s32, %s239
          %s241 = smul.addr %s240, 64
          %s242 = scalar_lea.hbm %s0, %s241
          %s243 = sshll.u32 %s234, 4
          %s244 = int_to_ptr.vmem [resolvable:$true] %s243
          %249 = dma.hbm_to_vmem [thread:$0]  %s242, 512, %s244, %s231, 128, 64, 4
        $region20: #{tpu_custom_call.1} parent=15 // pred_fallthru
          _
        // Predicated region
        $region21: #{tpu_custom_call.1} parent=15 // pred_check
          %p250 = pneg %p92
        $region22: #{tpu_custom_call.1} parent=15 // pred_check_branch
          %252 = sbr.rel (%p250) target = $region24
        $region23: #{tpu_custom_call.1} parent=15 // pred_region
          %s253 = sand.u32 %s23, 1
          %s254 = scalar_lea.sflag [#allocation8], %s253
          %s255 = sand.u32 %s82, 1
          %s256 = smul.addr %s255, 64
          %s257 = scalar_lea.vmem [#allocation7], %s256
          %s258 = smul.u32 16, %s32
          %s260 = ssub.s32 1024, 1024
          %261 = vsyncadd %s254, %s260
          %s262 = smul.addr %s258, 2
          %s263 = sadd.s32 %s31, %s262
          %s264 = smul.addr %s263, 64
          %s265 = scalar_lea.hbm %s1, %s264
          %s266 = sshll.u32 %s257, 4
          %s267 = int_to_ptr.vmem [resolvable:$true] %s266
          %272 = dma.hbm_to_vmem [thread:$0]  %s265, 1024, %s267, %s254, 128, 64, 4
        $region24: #{tpu_custom_call.1} parent=15 // pred_fallthru
          _
        // Predicated region
        $region25: #{tpu_custom_call.1} parent=15 // pred_check
          %p273 = pneg %p118
        $region26: #{tpu_custom_call.1} parent=15 // pred_check_branch
          %275 = sbr.rel (%p273) target = $region28
        $region27: #{tpu_custom_call.1} parent=15 // pred_region
          %s276 = sand.u32 %s23, 1
          %s277 = scalar_lea.sflag [#allocation8], %s276
          %s278 = sand.u32 %s108, 1
          %s279 = scalar_lea.vmem [#allocation9], %s278
          %s281 = ssub.s32 16, 16
          %282 = vsyncadd %s277, %s281
          %s283 = smul.addr %s31, 16
          %s284 = scalar_lea.hbm %s2, %s283
          %s286 = sshll.u32 %s279, 4
          %s287 = int_to_ptr.vmem [resolvable:$true] %s286
          %289 = dma.hbm_to_vmem [thread:$0]  %s284, 16, %s287, %s277
        $region28: #{tpu_custom_call.1} parent=15 // pred_fallthru
          _
        // Predicated region
        $region29: #{tpu_custom_call.1} parent=15 // pred_check
          %p290 = pneg %p148
        $region30: #{tpu_custom_call.1} parent=15 // pred_check_branch
          %292 = sbr.rel (%p290) target = $region32
        $region31: #{tpu_custom_call.1} parent=15 // pred_region
          %s293 = sand.u32 %s23, 1
          %s294 = scalar_lea.sflag [#allocation11], %s293
          %s295 = sand.u32 %s138, 1
          %s296 = smul.addr %s295, 64
          %s297 = scalar_lea.vmem [#allocation10], %s296
          %p298 = scmp.eq.s32.totalorder %s31, 0
          %s299 = scalar_select %p298, %s32, 0
          %s300 = smul.u32 16, %s299
          %s302 = ssub.s32 1024, 1024
          %303 = vsyncadd %s294, %s302
          %s304 = smul.addr %s300, 64
          %s305 = scalar_lea.hbm %s3, %s304
          %s306 = sshll.u32 %s297, 4
          %s307 = int_to_ptr.vmem [resolvable:$true] %s306
          %312 = dma.hbm_to_vmem [thread:$0]  %s305, 1024, %s307, %s294, 64, 64, 4
        $region32: #{tpu_custom_call.1} parent=15 // pred_fallthru
          _
        // Predicated region
        $region33: #{tpu_custom_call.1} parent=15 // pred_check
          %p313 = pneg %p174
        $region34: #{tpu_custom_call.1} parent=15 // pred_check_branch
          %315 = sbr.rel (%p313) target = $region36
        $region35: #{tpu_custom_call.1} parent=15 // pred_region
          %s316 = sand.u32 %s23, 1
          %s317 = scalar_lea.sflag [#allocation11], %s316
          %s318 = sand.u32 %s164, 1
          %s319 = smul.addr %s318, 64
          %s320 = scalar_lea.vmem [#allocation12], %s319
          %s322 = ssub.s32 1024, 1024
          %323 = vsyncadd %s317, %s322
          %s324 = smul.addr %s31, 64
          %s325 = scalar_lea.hbm %s4, %s324
          %s326 = sshll.u32 %s320, 4
          %s327 = int_to_ptr.vmem [resolvable:$true] %s326
          %332 = dma.hbm_to_vmem [thread:$0]  %s325, 1024, %s327, %s317, 128, 64, 4
        $region36: #{tpu_custom_call.1} parent=15 // pred_fallthru
          _
      $region16: #{tpu_custom_call.1} parent=5 // pred_fallthru
        _
      %p333 = scmp.le.s32.totalorder 1, %s23
      %p334 = scmp.lt.s32.totalorder %s23, 9
      %p335 = pnand %p333, %p334
      %p336 = pneg %p335
      // Predicated region
      $region37: #{tpu_custom_call.1} parent=5 // pred_check
        _
      $region38: #{tpu_custom_call.1} parent=5 // pred_check_branch
        %338 = sbr.rel (%p335) target = $region40
      $region39: #{tpu_custom_call.1} parent=5 // pred_region
        %s339 = ssub.s32 %s23, 1
        %s340 = sand.u32 %s57, 1
        %s341 = scalar_lea.sflag [#allocation5], %s340
        %s342 = sand.u32 %s57, 1
        %s343 = smul.addr %s342, 32
        %s344 = scalar_lea.vmem [#allocation4], %s343
        // Predicated region
        $region41: #{tpu_custom_call.1} parent=39 // pred_check
          %p345 = pneg %p70
        $region42: #{tpu_custom_call.1} parent=39 // pred_check_branch
          %347 = sbr.rel (%p345) target = $region44
        $region43: #{tpu_custom_call.1} parent=39 // pred_region
          %348 = dma.done %s341, 512
        $region44: #{tpu_custom_call.1} parent=39 // pred_fallthru
          _
        %s349 = sand.u32 %s28, 1
        %s350 = scalar_lea.sflag [#allocation8], %s349
        %s351 = sand.u32 %s85, 1
        %s352 = smul.addr %s351, 64
        %s353 = scalar_lea.vmem [#allocation7], %s352
        // Predicated region
        $region45: #{tpu_custom_call.1} parent=39 // pred_check
          %p354 = pneg %p98
        $region46: #{tpu_custom_call.1} parent=39 // pred_check_branch
          %356 = sbr.rel (%p354) target = $region48
        $region47: #{tpu_custom_call.1} parent=39 // pred_region
          %357 = dma.done %s350, 1024
        $region48: #{tpu_custom_call.1} parent=39 // pred_fallthru
          _
        %s358 = sand.u32 %s28, 1
        %s359 = scalar_lea.sflag [#allocation8], %s358
        %s360 = sand.u32 %s111, 1
        %s361 = scalar_lea.vmem [#allocation9], %s360
        // Predicated region
        $region49: #{tpu_custom_call.1} parent=39 // pred_check
          %p362 = pneg %p124
        $region50: #{tpu_custom_call.1} parent=39 // pred_check_branch
          %364 = sbr.rel (%p362) target = $region52
        $region51: #{tpu_custom_call.1} parent=39 // pred_region
          %365 = dma.done %s359, 16
        $region52: #{tpu_custom_call.1} parent=39 // pred_fallthru
          _
        %s366 = sand.u32 %s28, 1
        %s367 = scalar_lea.sflag [#allocation11], %s366
        %s368 = sand.u32 %s141, 1
        %s369 = smul.addr %s368, 64
        %s370 = scalar_lea.vmem [#allocation10], %s369
        // Predicated region
        $region53: #{tpu_custom_call.1} parent=39 // pred_check
          %p371 = pneg %p154
        $region54: #{tpu_custom_call.1} parent=39 // pred_check_branch
          %373 = sbr.rel (%p371) target = $region56
        $region55: #{tpu_custom_call.1} parent=39 // pred_region
          %374 = dma.done %s367, 1024
        $region56: #{tpu_custom_call.1} parent=39 // pred_fallthru
          _
        %s375 = sand.u32 %s28, 1
        %s376 = scalar_lea.sflag [#allocation11], %s375
        %s377 = sand.u32 %s167, 1
        %s378 = smul.addr %s377, 64
        %s379 = scalar_lea.vmem [#allocation12], %s378
        // Predicated region
        $region57: #{tpu_custom_call.1} parent=39 // pred_check
          %p380 = pneg %p180
        $region58: #{tpu_custom_call.1} parent=39 // pred_check_branch
          %382 = sbr.rel (%p380) target = $region60
        $region59: #{tpu_custom_call.1} parent=39 // pred_region
          %383 = dma.done %s376, 1024
        $region60: #{tpu_custom_call.1} parent=39 // pred_fallthru
          _
        %s384 = sand.u32 %s57, 1
        %s385 = scalar_lea.sflag [#allocation5], %s384
        %s386 = sand.u32 %s57, 1
        %s387 = smul.addr %s386, 32
        %s388 = scalar_lea.vmem [#allocation4], %s387
        %p389 = pneg %p70
        %p390 = pneg %p67
        %s391 = sand.u32 %s28, 1
        %s392 = scalar_lea.sflag [#allocation8], %s391
        %s393 = sand.u32 %s85, 1
        %s394 = smul.addr %s393, 64
        %s395 = scalar_lea.vmem [#allocation7], %s394
        %p396 = pneg %p98
        %p397 = pneg %p95
        %s398 = sand.u32 %s28, 1
        %s399 = scalar_lea.sflag [#allocation8], %s398
        %s400 = sand.u32 %s111, 1
        %s401 = scalar_lea.vmem [#allocation9], %s400
        %p402 = pneg %p124
        %p403 = pneg %p121
        %s404 = sand.u32 %s28, 1
        %s405 = scalar_lea.sflag [#allocation11], %s404
        %s406 = sand.u32 %s141, 1
        %s407 = smul.addr %s406, 64
        %s408 = scalar_lea.vmem [#allocation10], %s407
        %p409 = pneg %p154
        %p410 = pneg %p151
        %s411 = sand.u32 %s28, 1
        %s412 = scalar_lea.sflag [#allocation11], %s411
        %s413 = sand.u32 %s167, 1
        %s414 = smul.addr %s413, 64
        %s415 = scalar_lea.vmem [#allocation12], %s414
        %p416 = pneg %p180
        %p417 = pneg %p177
        %p418 = pneg %p208
        %p419 = pneg %p205
        %s420 = sand.u32 %s195, 1
        %s421 = scalar_lea.sflag [#allocation6], %s420
        %s422 = sand.u32 %s195, 1
        %s423 = smul.addr %s422, 64
        %s424 = scalar_lea.vmem [#allocation13], %s423
        %s425 = smul.u32 8, %s33
        %s426 = smul.u32 16, %s35
        %p427 = scmp.eq.s32.totalorder %s34, 0
        %s428 = scalar_select %p427, %s35, 0
        %s429 = smul.u32 16, %s428
        %s430 = smul.u32 8, %s33
        %p432 = scmp.eq.s32.totalorder %s35, 0
        // Predicated region
        $region61: #{tpu_custom_call.1} parent=39 // pred_check
          %p433 = pneg %p432
        $region62: #{tpu_custom_call.1} parent=39 // pred_check_branch
          %435 = sbr.rel (%p433) target = $region64
        $region63: #{tpu_custom_call.1} parent=39 // pred_region
          %v436 = vld [vmem:[%s361] sm:$0x1]
          %v438 = vlaneseq
          %v439 = vshrl.u32 %v438, 7
          %v440 = vsub.s32 0, %v439
          %v441 = vrot.slane %v436, %v440
          %443 = vst [vmem:[#allocation2] sm:$0xff] %v441
          %444 = vst [vmem:[#allocation2 + $0x8] sm:$0xff] %v441
          %445 = vst [vmem:[#allocation2 + $0x10] sm:$0xff] %v441
          %446 = vst [vmem:[#allocation2 + $0x18] sm:$0xff] %v441
          %447 = vst [vmem:[#allocation2 + $0x20] sm:$0xff] %v441
          %448 = vst [vmem:[#allocation2 + $0x28] sm:$0xff] %v441
          %449 = vst [vmem:[#allocation2 + $0x30] sm:$0xff] %v441
          %450 = vst [vmem:[#allocation2 + $0x38] sm:$0xff] %v441
        $region64: #{tpu_custom_call.1} parent=39 // pred_fallthru
          _
        %v451 = vld [vmem:[%s344] sm:$0xf]
        %v452 = vld [vmem:[%s344 + $0x4] sm:$0xf]
        %v453 = vld [vmem:[%s344 + $0x8] sm:$0xf]
        %v454 = vld [vmem:[%s344 + $0xc] sm:$0xf]
        %v455 = vld [vmem:[%s344 + $0x10] sm:$0xf]
        %v456 = vld [vmem:[%s344 + $0x14] sm:$0xf]
        %v457 = vld [vmem:[%s344 + $0x18] sm:$0xf]
        %v458 = vld [vmem:[%s344 + $0x1c] sm:$0xf]
        %v459 = vld [vmem:[#allocation2] sm:$0xff]
        %v460 = vld [vmem:[#allocation2 + $0x8] sm:$0xff]
        %v461 = vld [vmem:[#allocation2 + $0x10] sm:$0xff]
        %v462 = vld [vmem:[#allocation2 + $0x18] sm:$0xff]
        %v463 = vld [vmem:[#allocation2 + $0x20] sm:$0xff]
        %v464 = vld [vmem:[#allocation2 + $0x28] sm:$0xff]
        %v465 = vld [vmem:[#allocation2 + $0x30] sm:$0xff]
        %v466 = vld [vmem:[#allocation2 + $0x38] sm:$0xff]
        %v467 = vld [vmem:[%s353] sm:$0xf]
        %v468 = vld [vmem:[%s353 + $0x4] sm:$0xf]
        %v469 = vld [vmem:[%s353 + $0x8] sm:$0xf]
        %v470 = vld [vmem:[%s353 + $0xc] sm:$0xf]
        %v471 = vld [vmem:[%s353 + $0x10] sm:$0xf]
        %v472 = vld [vmem:[%s353 + $0x14] sm:$0xf]
        %v473 = vld [vmem:[%s353 + $0x18] sm:$0xf]
        %v474 = vld [vmem:[%s353 + $0x1c] sm:$0xf]
        %v475 = vld [vmem:[%s353 + $0x20] sm:$0xf]
        %v476 = vld [vmem:[%s353 + $0x24] sm:$0xf]
        %v477 = vld [vmem:[%s353 + $0x28] sm:$0xf]
        %v478 = vld [vmem:[%s353 + $0x2c] sm:$0xf]
        %v479 = vld [vmem:[%s353 + $0x30] sm:$0xf]
        %v480 = vld [vmem:[%s353 + $0x34] sm:$0xf]
        %v481 = vld [vmem:[%s353 + $0x38] sm:$0xf]
        %v482 = vld [vmem:[%s353 + $0x3c] sm:$0xf]
        %v491 = vunpack.c.l.b16 %v451
        %v492 = vunpack.c.l.b16 %v452
        %v493 = vunpack.c.l.b16 %v453
        %v494 = vunpack.c.l.b16 %v454
        %v495 = vunpack.c.l.b16 %v455
        %v496 = vunpack.c.l.b16 %v456
        %v497 = vunpack.c.l.b16 %v457
        %v498 = vunpack.c.l.b16 %v458
        %v499 = vpack.c.b16 %v492, %v491
        %v500 = vpack.c.b16 %v494, %v493
        %v501 = vpack.c.b16 %v496, %v495
        %v502 = vpack.c.b16 %v498, %v497
        %v523 = vunpack.c.l.b16 %v467
        %v524 = vunpack.c.l.b16 %v468
        %v525 = vunpack.c.l.b16 %v469
        %v526 = vunpack.c.l.b16 %v470
        %v527 = vunpack.c.l.b16 %v471
        %v528 = vunpack.c.l.b16 %v472
        %v529 = vunpack.c.l.b16 %v473
        %v530 = vunpack.c.l.b16 %v474
        %v531 = vunpack.c.l.b16 %v475
        %v532 = vunpack.c.l.b16 %v476
        %v533 = vunpack.c.l.b16 %v477
        %v534 = vunpack.c.l.b16 %v478
        %v535 = vunpack.c.l.b16 %v479
        %v536 = vunpack.c.l.b16 %v480
        %v537 = vunpack.c.l.b16 %v481
        %v538 = vunpack.c.l.b16 %v482
        %v539 = vpack.c.b16 %v524, %v523
        %v540 = vpack.c.b16 %v526, %v525
        %v541 = vpack.c.b16 %v528, %v527
        %v542 = vpack.c.b16 %v530, %v529
        %v543 = vpack.c.b16 %v532, %v531
        %v544 = vpack.c.b16 %v534, %v533
        %v545 = vpack.c.b16 %v536, %v535
        %v546 = vpack.c.b16 %v538, %v537
        %555 = vmatprep.subr.bf16.mxu0 0
        %556 = vmatpush1.bf16.msra.mxu0 %v539
        %557 = vmatprep.subr.bf16.mxu0 0
        %558 = vmatpush1.bf16.msra.mxu0 %v540
        %559 = vmatprep.subr.bf16.mxu0 0
        %560 = vmatpush1.bf16.msra.mxu0 %v541
        %561 = vmatprep.subr.bf16.mxu0 0
        %562 = vmatpush1.bf16.msra.mxu0 %v542
        %563 = vmatprep.subr.bf16.mxu0 0
        %564 = vmatpush1.bf16.msra.mxu0 %v543
        %565 = vmatprep.subr.bf16.mxu0 0
        %566 = vmatpush1.bf16.msra.mxu0 %v544
        %567 = vmatprep.subr.bf16.mxu0 0
        %568 = vmatpush1.bf16.msra.mxu0 %v545
        %569 = vmatprep.subr.bf16.mxu0 0
        %570 = vmatpush1.bf16.msra.mxu0 %v546
        %571 = vmatprep.subr.bf16.mxu0 0
        %572 = vmatpush1.bf16.msra.mxu0 0
        %573 = vmatprep.subr.bf16.mxu0 0
        %574 = vmatpush1.bf16.msra.mxu0 0
        %575 = vmatprep.subr.bf16.mxu0 0
        %576 = vmatpush1.bf16.msra.mxu0 0
        %577 = vmatprep.subr.bf16.mxu0 0
        %578 = vmatpush1.bf16.msra.mxu0 0
        %579 = vmatprep.subr.bf16.mxu0 0
        %580 = vmatpush1.bf16.msra.mxu0 0
        %581 = vmatprep.subr.bf16.mxu0 0
        %582 = vmatpush1.bf16.msra.mxu0 0
        %583 = vmatprep.subr.bf16.mxu0 0
        %584 = vmatpush1.bf16.msra.mxu0 0
        %585 = vmatprep.subr.bf16.mxu0 0
        %586 = vmatpush1.bf16.msra.mxu0 0
        %587 = vmatprep.mubr.bf16.mxu0 0
        %588 = vmatmul.mubr.bf16.gmra.mrb[0].mxu0 %v499
        %v589 = vpop.f32.mrb[0].mxu0
        %v590 = vadd.f32 0.0, %v589
        %v591 = vpop.f32.mrb[0].mxu0
        %v592 = vpop.f32.mrb[0].mxu0
        %v593 = vadd.f32 0.0, %v592
        %v594 = vpop.f32.mrb[0].mxu0
        %595 = vmatprep.mubr.bf16.mxu0 0
        %596 = vmatmul.mubr.bf16.gmra.mrb[0].mxu0 %v500
        %v597 = vpop.f32.mrb[0].mxu0
        %v598 = vadd.f32 0.0, %v597
        %v599 = vpop.f32.mrb[0].mxu0
        %v600 = vpop.f32.mrb[0].mxu0
        %v601 = vadd.f32 0.0, %v600
        %v602 = vpop.f32.mrb[0].mxu0
        %603 = vmatprep.mubr.bf16.mxu0 0
        %604 = vmatmul.mubr.bf16.gmra.mrb[0].mxu0 %v501
        %v605 = vpop.f32.mrb[0].mxu0
        %v606 = vadd.f32 0.0, %v605
        %v607 = vpop.f32.mrb[0].mxu0
        %v608 = vpop.f32.mrb[0].mxu0
        %v609 = vadd.f32 0.0, %v608
        %v610 = vpop.f32.mrb[0].mxu0
        %611 = vmatprep.mubr.bf16.mxu0 0
        %612 = vmatmul.mubr.bf16.gmra.mrb[0].mxu0 %v502
        %v613 = vpop.f32.mrb[0].mxu0
        %v614 = vadd.f32 0.0, %v613
        %v615 = vpop.f32.mrb[0].mxu0
        %v616 = vpop.f32.mrb[0].mxu0
        %v617 = vadd.f32 0.0, %v616
        %v618 = vpop.f32.mrb[0].mxu0
        %619 = vdwg.mxu0
        %v620 = vadd.f32 %v459, %v590
        %v621 = vadd.f32 %v460, %v593
        %v622 = vadd.f32 %v461, %v598
        %v623 = vadd.f32 %v462, %v601
        %v624 = vadd.f32 %v463, %v606
        %v625 = vadd.f32 %v464, %v609
        %v626 = vadd.f32 %v465, %v614
        %v627 = vadd.f32 %v466, %v617
        %628 = vst [vmem:[#allocation2] sm:$0xff] %v620
        %629 = vst [vmem:[#allocation2 + $0x8] sm:$0xff] %v621
        %630 = vst [vmem:[#allocation2 + $0x10] sm:$0xff] %v622
        %631 = vst [vmem:[#allocation2 + $0x18] sm:$0xff] %v623
        %632 = vst [vmem:[#allocation2 + $0x20] sm:$0xff] %v624
        %633 = vst [vmem:[#allocation2 + $0x28] sm:$0xff] %v625
        %634 = vst [vmem:[#allocation2 + $0x30] sm:$0xff] %v626
        %635 = vst [vmem:[#allocation2 + $0x38] sm:$0xff] %v627
        %p636 = scmp.eq.s32.totalorder %s34, 0
        // Predicated region
        $region65: #{tpu_custom_call.1} parent=39 // pred_check
          %p637 = pneg %p636
        $region66: #{tpu_custom_call.1} parent=39 // pred_check_branch
          %639 = sbr.rel (%p637) target = $region68
        $region67: #{tpu_custom_call.1} parent=39 // pred_region
          // Predicated region
          $region69: #{tpu_custom_call.1} parent=67 // pred_check
            %p640 = pneg %p432
          $region70: #{tpu_custom_call.1} parent=67 // pred_check_branch
            %642 = sbr.rel (%p640) target = $region72
          $region71: #{tpu_custom_call.1} parent=67 // pred_region
            %643 = vst [vmem:[#allocation3] sm:$0xff] 0.0
            %644 = vst [vmem:[#allocation3 + $0x8] sm:$0xff] 0.0
            %645 = vst [vmem:[#allocation3 + $0x10] sm:$0xff] 0.0
            %646 = vst [vmem:[#allocation3 + $0x18] sm:$0xff] 0.0
            %647 = vst [vmem:[#allocation3 + $0x20] sm:$0xff] 0.0
            %648 = vst [vmem:[#allocation3 + $0x28] sm:$0xff] 0.0
            %649 = vst [vmem:[#allocation3 + $0x30] sm:$0xff] 0.0
            %650 = vst [vmem:[#allocation3 + $0x38] sm:$0xff] 0.0
          $region72: #{tpu_custom_call.1} parent=67 // pred_fallthru
            _
          %v651 = vld [vmem:[#allocation3] sm:$0xff]
          %v652 = vld [vmem:[#allocation3 + $0x8] sm:$0xff]
          %v653 = vld [vmem:[#allocation3 + $0x10] sm:$0xff]
          %v654 = vld [vmem:[#allocation3 + $0x18] sm:$0xff]
          %v655 = vld [vmem:[#allocation3 + $0x20] sm:$0xff]
          %v656 = vld [vmem:[#allocation3 + $0x28] sm:$0xff]
          %v657 = vld [vmem:[#allocation3 + $0x30] sm:$0xff]
          %v658 = vld [vmem:[#allocation3 + $0x38] sm:$0xff]
          %v659 = vld [vmem:[%s370] sm:$0xf]
          %v660 = vld [vmem:[%s370 + $0x4] sm:$0xf]
          %v661 = vld [vmem:[%s370 + $0x8] sm:$0xf]
          %v662 = vld [vmem:[%s370 + $0xc] sm:$0xf]
          %v663 = vld [vmem:[%s370 + $0x10] sm:$0xf]
          %v664 = vld [vmem:[%s370 + $0x14] sm:$0xf]
          %v665 = vld [vmem:[%s370 + $0x18] sm:$0xf]
          %v666 = vld [vmem:[%s370 + $0x1c] sm:$0xf]
          %v667 = vld [vmem:[%s370 + $0x20] sm:$0xf]
          %v668 = vld [vmem:[%s370 + $0x24] sm:$0xf]
          %v669 = vld [vmem:[%s370 + $0x28] sm:$0xf]
          %v670 = vld [vmem:[%s370 + $0x2c] sm:$0xf]
          %v671 = vld [vmem:[%s370 + $0x30] sm:$0xf]
          %v672 = vld [vmem:[%s370 + $0x34] sm:$0xf]
          %v673 = vld [vmem:[%s370 + $0x38] sm:$0xf]
          %v674 = vld [vmem:[%s370 + $0x3c] sm:$0xf]
          %v691 = vunpack.c.l.b16 %v659
          %v692 = vunpack.c.l.b16 %v660
          %v693 = vunpack.c.l.b16 %v661
          %v694 = vunpack.c.l.b16 %v662
          %v695 = vunpack.c.l.b16 %v663
          %v696 = vunpack.c.l.b16 %v664
          %v697 = vunpack.c.l.b16 %v665
          %v698 = vunpack.c.l.b16 %v666
          %v699 = vunpack.c.l.b16 %v667
          %v700 = vunpack.c.l.b16 %v668
          %v701 = vunpack.c.l.b16 %v669
          %v702 = vunpack.c.l.b16 %v670
          %v703 = vunpack.c.l.b16 %v671
          %v704 = vunpack.c.l.b16 %v672
          %v705 = vunpack.c.l.b16 %v673
          %v706 = vunpack.c.l.b16 %v674
          %v707 = vpack.c.b16 %v692, %v691
          %v708 = vpack.c.b16 %v694, %v693
          %v709 = vpack.c.b16 %v696, %v695
          %v710 = vpack.c.b16 %v698, %v697
          %v711 = vpack.c.b16 %v700, %v699
          %v712 = vpack.c.b16 %v702, %v701
          %v713 = vpack.c.b16 %v704, %v703
          %v714 = vpack.c.b16 %v706, %v705
          %723 = vmatprep.subr.bf16.mxu0 0
          %724 = vmatpush1.bf16.msra.mxu0 %v707
          %725 = vmatprep.subr.bf16.mxu0 0
          %726 = vmatpush1.bf16.msra.mxu0 %v708
          %727 = vmatprep.subr.bf16.mxu0 0
          %728 = vmatpush1.bf16.msra.mxu0 %v709
          %729 = vmatprep.subr.bf16.mxu0 0
          %730 = vmatpush1.bf16.msra.mxu0 %v710
          %731 = vmatprep.subr.bf16.mxu0 0
          %732 = vmatpush1.bf16.msra.mxu0 %v711
          %733 = vmatprep.subr.bf16.mxu0 0
          %734 = vmatpush1.bf16.msra.mxu0 %v712
          %735 = vmatprep.subr.bf16.mxu0 0
          %736 = vmatpush1.bf16.msra.mxu0 %v713
          %737 = vmatprep.subr.bf16.mxu0 0
          %738 = vmatpush1.bf16.msra.mxu0 %v714
          %739 = vmatprep.subr.bf16.mxu0 0
          %740 = vmatpush1.bf16.msra.mxu0 0
          %741 = vmatprep.subr.bf16.mxu0 0
          %742 = vmatpush1.bf16.msra.mxu0 0
          %743 = vmatprep.subr.bf16.mxu0 0
          %744 = vmatpush1.bf16.msra.mxu0 0
          %745 = vmatprep.subr.bf16.mxu0 0
          %746 = vmatpush1.bf16.msra.mxu0 0
          %747 = vmatprep.subr.bf16.mxu0 0
          %748 = vmatpush1.bf16.msra.mxu0 0
          %749 = vmatprep.subr.bf16.mxu0 0
          %750 = vmatpush1.bf16.msra.mxu0 0
          %751 = vmatprep.subr.bf16.mxu0 0
          %752 = vmatpush1.bf16.msra.mxu0 0
          %753 = vmatprep.subr.bf16.mxu0 0
          %754 = vmatpush1.bf16.msra.mxu0 0
          %755 = vmatprep.mubr.bf16.mxu0 0
          %756 = vmatmul.mubr.bf16.gmra.mrb[0].mxu0 %v499
          %v757 = vpop.f32.mrb[0].mxu0
          %v758 = vadd.f32 0.0, %v757
          %v759 = vpop.f32.mrb[0].mxu0
          %v760 = vpop.f32.mrb[0].mxu0
          %v761 = vadd.f32 0.0, %v760
          %v762 = vpop.f32.mrb[0].mxu0
          %763 = vmatprep.mubr.bf16.mxu0 0
          %764 = vmatmul.mubr.bf16.gmra.mrb[0].mxu0 %v500
          %v765 = vpop.f32.mrb[0].mxu0
          %v766 = vadd.f32 0.0, %v765
          %v767 = vpop.f32.mrb[0].mxu0
          %v768 = vpop.f32.mrb[0].mxu0
          %v769 = vadd.f32 0.0, %v768
          %v770 = vpop.f32.mrb[0].mxu0
          %771 = vmatprep.mubr.bf16.mxu0 0
          %772 = vmatmul.mubr.bf16.gmra.mrb[0].mxu0 %v501
          %v773 = vpop.f32.mrb[0].mxu0
          %v774 = vadd.f32 0.0, %v773
          %v775 = vpop.f32.mrb[0].mxu0
          %v776 = vpop.f32.mrb[0].mxu0
          %v777 = vadd.f32 0.0, %v776
          %v778 = vpop.f32.mrb[0].mxu0
          %779 = vmatprep.mubr.bf16.mxu0 0
          %780 = vmatmul.mubr.bf16.gmra.mrb[0].mxu0 %v502
          %v781 = vpop.f32.mrb[0].mxu0
          %v782 = vadd.f32 0.0, %v781
          %v783 = vpop.f32.mrb[0].mxu0
          %v784 = vpop.f32.mrb[0].mxu0
          %v785 = vadd.f32 0.0, %v784
          %v786 = vpop.f32.mrb[0].mxu0
          %787 = vdwg.mxu0
          %v788 = vadd.f32 %v651, %v758
          %v789 = vadd.f32 %v652, %v761
          %v790 = vadd.f32 %v653, %v766
          %v791 = vadd.f32 %v654, %v769
          %v792 = vadd.f32 %v655, %v774
          %v793 = vadd.f32 %v656, %v777
          %v794 = vadd.f32 %v657, %v782
          %v795 = vadd.f32 %v658, %v785
          %796 = vst [vmem:[#allocation3] sm:$0xff] %v788
          %797 = vst [vmem:[#allocation3 + $0x8] sm:$0xff] %v789
          %798 = vst [vmem:[#allocation3 + $0x10] sm:$0xff] %v790
          %799 = vst [vmem:[#allocation3 + $0x18] sm:$0xff] %v791
          %800 = vst [vmem:[#allocation3 + $0x20] sm:$0xff] %v792
          %801 = vst [vmem:[#allocation3 + $0x28] sm:$0xff] %v793
          %802 = vst [vmem:[#allocation3 + $0x30] sm:$0xff] %v794
          %803 = vst [vmem:[#allocation3 + $0x38] sm:$0xff] %v795
        $region68: #{tpu_custom_call.1} parent=39 // pred_fallthru
          _
        %p804 = scmp.eq.s32.totalorder %s35, 1
        // Predicated region
        $region73: #{tpu_custom_call.1} parent=39 // pred_check
          %p805 = pneg %p804
        $region74: #{tpu_custom_call.1} parent=39 // pred_check_branch
          %807 = sbr.rel (%p805) target = $region76
        $region75: #{tpu_custom_call.1} parent=39 // pred_region
          %v808 = vld [vmem:[#allocation3] sm:$0xff]
          %v809 = vld [vmem:[#allocation3 + $0x8] sm:$0xff]
          %v810 = vld [vmem:[#allocation3 + $0x10] sm:$0xff]
          %v811 = vld [vmem:[#allocation3 + $0x18] sm:$0xff]
          %v812 = vld [vmem:[#allocation3 + $0x20] sm:$0xff]
          %v813 = vld [vmem:[#allocation3 + $0x28] sm:$0xff]
          %v814 = vld [vmem:[#allocation3 + $0x30] sm:$0xff]
          %v815 = vld [vmem:[#allocation3 + $0x38] sm:$0xff]
          %v816 = vpack.c.bf16 %v809, %v808
          %v817 = vpack.c.bf16 %v811, %v810
          %v818 = vpack.c.bf16 %v813, %v812
          %v819 = vpack.c.bf16 %v815, %v814
          %v820 = vld [vmem:[%s379] sm:$0xf]
          %v821 = vld [vmem:[%s379 + $0x4] sm:$0xf]
          %v822 = vld [vmem:[%s379 + $0x8] sm:$0xf]
          %v823 = vld [vmem:[%s379 + $0xc] sm:$0xf]
          %v824 = vld [vmem:[%s379 + $0x10] sm:$0xf]
          %v825 = vld [vmem:[%s379 + $0x14] sm:$0xf]
          %v826 = vld [vmem:[%s379 + $0x18] sm:$0xf]
          %v827 = vld [vmem:[%s379 + $0x1c] sm:$0xf]
          %v828 = vld [vmem:[%s379 + $0x20] sm:$0xf]
          %v829 = vld [vmem:[%s379 + $0x24] sm:$0xf]
          %v830 = vld [vmem:[%s379 + $0x28] sm:$0xf]
          %v831 = vld [vmem:[%s379 + $0x2c] sm:$0xf]
          %v832 = vld [vmem:[%s379 + $0x30] sm:$0xf]
          %v833 = vld [vmem:[%s379 + $0x34] sm:$0xf]
          %v834 = vld [vmem:[%s379 + $0x38] sm:$0xf]
          %v835 = vld [vmem:[%s379 + $0x3c] sm:$0xf]
          %v852 = vunpack.c.l.b16 %v820
          %v853 = vunpack.c.l.b16 %v821
          %v854 = vunpack.c.l.b16 %v822
          %v855 = vunpack.c.l.b16 %v823
          %v856 = vunpack.c.l.b16 %v824
          %v857 = vunpack.c.l.b16 %v825
          %v858 = vunpack.c.l.b16 %v826
          %v859 = vunpack.c.l.b16 %v827
          %v860 = vunpack.c.l.b16 %v828
          %v861 = vunpack.c.l.b16 %v829
          %v862 = vunpack.c.l.b16 %v830
          %v863 = vunpack.c.l.b16 %v831
          %v864 = vunpack.c.l.b16 %v832
          %v865 = vunpack.c.l.b16 %v833
          %v866 = vunpack.c.l.b16 %v834
          %v867 = vunpack.c.l.b16 %v835
          %v868 = vpack.c.b16 %v853, %v852
          %v869 = vpack.c.b16 %v855, %v854
          %v870 = vpack.c.b16 %v857, %v856
          %v871 = vpack.c.b16 %v859, %v858
          %v872 = vpack.c.b16 %v861, %v860
          %v873 = vpack.c.b16 %v863, %v862
          %v874 = vpack.c.b16 %v865, %v864
          %v875 = vpack.c.b16 %v867, %v866
          %884 = vmatprep.subr.bf16.mxu0 0
          %885 = vmatpush1.bf16.msra.mxu0 %v868
          %886 = vmatprep.subr.bf16.mxu0 0
          %887 = vmatpush1.bf16.msra.mxu0 %v869
          %888 = vmatprep.subr.bf16.mxu0 0
          %889 = vmatpush1.bf16.msra.mxu0 %v870
          %890 = vmatprep.subr.bf16.mxu0 0
          %891 = vmatpush1.bf16.msra.mxu0 %v871
          %892 = vmatprep.subr.bf16.mxu0 0
          %893 = vmatpush1.bf16.msra.mxu0 %v872
          %894 = vmatprep.subr.bf16.mxu0 0
          %895 = vmatpush1.bf16.msra.mxu0 %v873
          %896 = vmatprep.subr.bf16.mxu0 0
          %897 = vmatpush1.bf16.msra.mxu0 %v874
          %898 = vmatprep.subr.bf16.mxu0 0
          %899 = vmatpush1.bf16.msra.mxu0 %v875
          %900 = vmatprep.subr.bf16.mxu0 0
          %901 = vmatpush1.bf16.msra.mxu0 0
          %902 = vmatprep.subr.bf16.mxu0 0
          %903 = vmatpush1.bf16.msra.mxu0 0
          %904 = vmatprep.subr.bf16.mxu0 0
          %905 = vmatpush1.bf16.msra.mxu0 0
          %906 = vmatprep.subr.bf16.mxu0 0
          %907 = vmatpush1.bf16.msra.mxu0 0
          %908 = vmatprep.subr.bf16.mxu0 0
          %909 = vmatpush1.bf16.msra.mxu0 0
          %910 = vmatprep.subr.bf16.mxu0 0
          %911 = vmatpush1.bf16.msra.mxu0 0
          %912 = vmatprep.subr.bf16.mxu0 0
          %913 = vmatpush1.bf16.msra.mxu0 0
          %914 = vmatprep.subr.bf16.mxu0 0
          %915 = vmatpush1.bf16.msra.mxu0 0
          %916 = vmatprep.mubr.bf16.mxu0 0
          %917 = vmatmul.mubr.bf16.gmra.mrb[0].mxu0 %v816
          %v918 = vpop.f32.mrb[0].mxu0
          %v919 = vadd.f32 0.0, %v918
          %v920 = vpop.f32.mrb[0].mxu0
          %v921 = vpop.f32.mrb[0].mxu0
          %v922 = vadd.f32 0.0, %v921
          %v923 = vpop.f32.mrb[0].mxu0
          %924 = vmatprep.mubr.bf16.mxu0 0
          %925 = vmatmul.mubr.bf16.gmra.mrb[0].mxu0 %v817
          %v926 = vpop.f32.mrb[0].mxu0
          %v927 = vadd.f32 0.0, %v926
          %v928 = vpop.f32.mrb[0].mxu0
          %v929 = vpop.f32.mrb[0].mxu0
          %v930 = vadd.f32 0.0, %v929
          %v931 = vpop.f32.mrb[0].mxu0
          %932 = vmatprep.mubr.bf16.mxu0 0
          %933 = vmatmul.mubr.bf16.gmra.mrb[0].mxu0 %v818
          %v934 = vpop.f32.mrb[0].mxu0
          %v935 = vadd.f32 0.0, %v934
          %v936 = vpop.f32.mrb[0].mxu0
          %v937 = vpop.f32.mrb[0].mxu0
          %v938 = vadd.f32 0.0, %v937
          %v939 = vpop.f32.mrb[0].mxu0
          %940 = vmatprep.mubr.bf16.mxu0 0
          %941 = vmatmul.mubr.bf16.gmra.mrb[0].mxu0 %v819
          %v942 = vpop.f32.mrb[0].mxu0
          %v943 = vadd.f32 0.0, %v942
          %v944 = vpop.f32.mrb[0].mxu0
          %v945 = vpop.f32.mrb[0].mxu0
          %v946 = vadd.f32 0.0, %v945
          %v947 = vpop.f32.mrb[0].mxu0
          %948 = vdwg.mxu0
          %v949 = vld [vmem:[#allocation2] sm:$0xff]
          %v950 = vld [vmem:[#allocation2 + $0x8] sm:$0xff]
          %v951 = vld [vmem:[#allocation2 + $0x10] sm:$0xff]
          %v952 = vld [vmem:[#allocation2 + $0x18] sm:$0xff]
          %v953 = vld [vmem:[#allocation2 + $0x20] sm:$0xff]
          %v954 = vld [vmem:[#allocation2 + $0x28] sm:$0xff]
          %v955 = vld [vmem:[#allocation2 + $0x30] sm:$0xff]
          %v956 = vld [vmem:[#allocation2 + $0x38] sm:$0xff]
          %v957 = vadd.f32 %v949, %v919
          %v958 = vadd.f32 %v950, %v922
          %v959 = vadd.f32 %v951, %v927
          %v960 = vadd.f32 %v952, %v930
          %v961 = vadd.f32 %v953, %v935
          %v962 = vadd.f32 %v954, %v938
          %v963 = vadd.f32 %v955, %v943
          %v964 = vadd.f32 %v956, %v946
          %965 = vst [vmem:[%s424] sm:$0xff] %v957
          %966 = vst [vmem:[%s424 + $0x8] sm:$0xff] %v958
          %967 = vst [vmem:[%s424 + $0x10] sm:$0xff] %v959
          %968 = vst [vmem:[%s424 + $0x18] sm:$0xff] %v960
          %969 = vst [vmem:[%s424 + $0x20] sm:$0xff] %v961
          %970 = vst [vmem:[%s424 + $0x28] sm:$0xff] %v962
          %971 = vst [vmem:[%s424 + $0x30] sm:$0xff] %v963
          %972 = vst [vmem:[%s424 + $0x38] sm:$0xff] %v964
        $region76: #{tpu_custom_call.1} parent=39 // pred_fallthru
          _
        %s973 = sand.u32 %s195, 1
        %s974 = scalar_lea.sflag [#allocation6], %s973
        %s975 = sand.u32 %s195, 1
        %s976 = smul.addr %s975, 64
        %s977 = scalar_lea.vmem [#allocation13], %s976
        // Predicated region
        $region77: #{tpu_custom_call.1} parent=39 // pred_check
          %p978 = pneg %p205
        $region78: #{tpu_custom_call.1} parent=39 // pred_check_branch
          %980 = sbr.rel (%p978) target = $region80
        $region79: #{tpu_custom_call.1} parent=39 // pred_region
          %s981 = smul.u32 8, %s33
          %s983 = ssub.s32 1024, 1024
          %984 = vsyncadd %s974, %s983
          %s985 = smul.addr %s981, 2
          %s986 = sadd.s32 %s34, %s985
          %s987 = smul.addr %s986, 128
          %s988 = scalar_lea.hbm %s5, %s987
          %s989 = sshll.u32 %s977, 4
          %s990 = int_to_ptr.vmem [resolvable:$true] %s989
          %995 = dma.vmem_to_hbm [thread:$0]  %s990, 1024, %s988, %s974, 128, 256, 8
        $region80: #{tpu_custom_call.1} parent=39 // pred_fallthru
          _
      $region40: #{tpu_custom_call.1} parent=5 // pred_fallthru
        _
      %p996 = scmp.le.s32.totalorder 2, %s23
      // Predicated region
      $region81: #{tpu_custom_call.1} parent=5 // pred_check
        %p997 = pneg %p996
      $region82: #{tpu_custom_call.1} parent=5 // pred_check_branch
        %999 = sbr.rel (%p997) target = $region84
      $region83: #{tpu_custom_call.1} parent=5 // pred_region
        %s1000 = ssub.s32 %s23, 2
        // Predicated region
        $region85: #{tpu_custom_call.1} parent=83 // pred_check
          %p1001 = pneg %p211
        $region86: #{tpu_custom_call.1} parent=83 // pred_check_branch
          %1003 = sbr.rel (%p1001) target = $region88
        $region87: #{tpu_custom_call.1} parent=83 // pred_region
          %s1004 = sand.u32 %s196, 1
          %s1005 = scalar_lea.sflag [#allocation6], %s1004
          %s1006 = sand.u32 %s196, 1
          %s1007 = smul.addr %s1006, 64
          %s1008 = scalar_lea.vmem [#allocation13], %s1007
          %1009 = dma.done %s1005, 1024
        $region88: #{tpu_custom_call.1} parent=83 // pred_fallthru
          _
      $region84: #{tpu_custom_call.1} parent=5 // pred_fallthru
        _
    $region6: #{tpu_custom_call.1} parent=1 // loop_footer
      %s27 = sadd.s32 1, %s23
    $region7: #{tpu_custom_call.1} parent=1 // loop_footer_branch
      %22 = sbr.rel target = $region3
    $region8: #{tpu_custom_call.1} parent=1 // loop_exit
      _
    %1010 = vsyncpa [#allocation5], 1
    %s1011 = scalar_lea.sflag [#allocation5], 1
    %1012 = vsyncpa %s1011, 1
    %1013 = vsyncpa [#allocation8], 1
    %s1014 = scalar_lea.sflag [#allocation8], 1
    %1015 = vsyncpa %s1014, 1
    %1016 = vsyncpa [#allocation11], 1
    %s1017 = scalar_lea.sflag [#allocation11], 1
    %1018 = vsyncpa %s1017, 1
    %1019 = vsyncpa [#allocation6], 1
    %s1020 = scalar_lea.sflag [#allocation6], 1
    %1021 = vsyncpa %s1020, 1

</llo_original>
